<compile_context>
chip_gen: v5e
topology: v5e:2x2
jax: 0.10.0
libtpu: 0.0.40
codegen_flags: <defaults>
</compile_context>

<pallas_src>
import jax
import jax.numpy as jnp
from jax.experimental import pallas as pl
from jax.experimental.pallas import tpu as pltpu


C_OUT = 128          # out channels of both convs
DEFAULT_TP = 512     # pixel-tile width (lane axis); multiple of 128

# Optional: cast matmul inputs to bf16 (roughly 2x MXU throughput on v6e/v7x).
# Left False so the 1e-4 check against the f32 reference holds exactly; the
# kernel is HBM-bandwidth bound anyway, so the f32 MXU path costs little.
USE_BF16_MATMUL = False


def _round_up(x, m):
    return ((x + m - 1) // m) * m


def _fused_kernel(x_ref, w1_ref, b1_ref, w2_ref, b2_ref, o_ref):
    # x_ref  : (1, 1, TP)      pixel values for one batch slab
    # w1_ref : (128, 1)        conv1 weight as a column
    # b1_ref : (128, 1)
    # w2_ref : (128, 128)      conv2 weight, (out_c, in_c) -- natural layout
    # b2_ref : (128, 1)
    # o_ref  : (1, 128, TP)    NCHW output slab
    x = x_ref[0]                                            # (1, TP)
    # v2 - v1 == relu(v1) - v1 == relu(-v1); fold into one max.
    d = jnp.maximum(-(w1_ref[...] * x + b1_ref[...]), 0.0)  # (128, TP)
    if USE_BF16_MATMUL:
        v3 = jnp.dot(w2_ref[...].astype(jnp.bfloat16),
                     d.astype(jnp.bfloat16),
                     preferred_element_type=jnp.float32) + b2_ref[...]
    else:
        v3 = jnp.dot(w2_ref[...], d,
                     preferred_element_type=jnp.float32) + b2_ref[...]
    o_ref[0] = jnp.maximum(v3, 0.0)                         # (128, TP)


def fused_forward(x_nchw, w1, b1, w2, b2, tp=DEFAULT_TP):
    """x_nchw: (N, 1, H, W) float32.  Returns (N, 128, H, W) float32 (NCHW)."""
    N, Cin, H, W = x_nchw.shape
    assert Cin == 1
    HW = H * W

    # Pick a lane-dense pixel tile; pad HW only if needed (input is a single
    # channel, so the pad is tiny; the output tail slice only happens on the
    # padded path).
    TP = min(tp, _round_up(HW, 128))
    HW_pad = _round_up(HW, TP)

    x_flat = x_nchw.reshape(N, 1, HW)
    if HW_pad != HW:
        x_flat = jnp.pad(x_flat, ((0, 0), (0, 0), (0, HW_pad - HW)))

    w1_col = w1.reshape(C_OUT, 1)
    b1_col = b1.reshape(C_OUT, 1)
    w2_mat = w2.reshape(C_OUT, C_OUT)        # (out_c, in_c)
    b2_col = b2.reshape(C_OUT, 1)

    grid = (N, HW_pad // TP)
    out_flat = pl.pallas_call(
        _fused_kernel,
        out_shape=jax.ShapeDtypeStruct((N, C_OUT, HW_pad), jnp.float32),
        grid_spec=pltpu.PrefetchScalarGridSpec(
            num_scalar_prefetch=0,
            grid=grid,
            in_specs=[
                pl.BlockSpec((1, 1, TP), lambda n, p: (n, 0, p)),
                pl.BlockSpec((C_OUT, 1), lambda n, p: (0, 0)),
                pl.BlockSpec((C_OUT, 1), lambda n, p: (0, 0)),
                pl.BlockSpec((C_OUT, C_OUT), lambda n, p: (0, 0)),
                pl.BlockSpec((C_OUT, 1), lambda n, p: (0, 0)),
            ],
            out_specs=pl.BlockSpec((1, C_OUT, TP), lambda n, p: (n, 0, p)),
        ),
        compiler_params=pltpu.CompilerParams(
            dimension_semantics=("parallel", "parallel")),
    )(x_flat, w1_col, b1_col, w2_mat, b2_col)

    if HW_pad != HW:
        out_flat = out_flat[:, :, :HW]       # drop padded tail pixels
    return out_flat.reshape(N, C_OUT, H, W)  # already NCHW, free reshape


def reference_forward(x_nchw, w1, b1, w2, b2):
    """Plain-JAX reference of the same fused math (for sanity check)."""
    N, _, H, W = x_nchw.shape
    x = x_nchw.reshape(N, 1, H * W)
    v1 = w1.reshape(1, C_OUT, 1) * x + b1.reshape(1, C_OUT, 1)
    d = jnp.maximum(v1, 0.0) - v1
    v3 = jnp.einsum("oi,nip->nop", w2.reshape(C_OUT, C_OUT), d) \
        + b2.reshape(1, C_OUT, 1)
    return jnp.maximum(v3, 0.0).reshape(N, C_OUT, H, W)


if __name__ == "__main__":
    key = jax.random.PRNGKey(0)
    k_x1, k_x2, k_w1, k_b1, k_w2, k_b2 = jax.random.split(key, 6)

    # deterministic parameter init (uniform, PyTorch-conv-style bounds)
    bound1 = 1.0  # fan_in = 1 * 1 * 1
    w1 = jax.random.uniform(k_w1, (C_OUT, 1, 1, 1), jnp.float32, -bound1, bound1)
    b1 = jax.random.uniform(k_b1, (C_OUT,), jnp.float32, -bound1, bound1)
    bound2 = 1.0 / (C_OUT ** 0.5)  # fan_in = 128 * 1 * 1
    w2 = jax.random.uniform(k_w2, (C_OUT, C_OUT, 1, 1), jnp.float32, -bound2, bound2)
    b2 = jax.random.uniform(k_b2, (C_OUT,), jnp.float32, -bound2, bound2)

    # Case 1: small shape (no padding path), N=2 gives >=2 parallel grid steps.
    x_small = jax.random.normal(k_x1, (2, 1, 16, 16), dtype=jnp.float32)
    out_small = fused_forward(x_small, w1, b1, w2, b2)
    jax.block_until_ready(out_small)
    ref_small = reference_forward(x_small, w1, b1, w2, b2)
    assert out_small.shape == (2, C_OUT, 16, 16)
    assert jnp.allclose(out_small, ref_small, atol=1e-4, rtol=1e-4)

    # Case 2: the original module's input shape (exercises the padded tail).
    x_spec = jax.random.normal(k_x2, (1, 1, 65, 65), dtype=jnp.float32)
    out_spec = fused_forward(x_spec, w1, b1, w2, b2)
    jax.block_until_ready(out_spec)
    ref_spec = reference_forward(x_spec, w1, b1, w2, b2)
    assert out_spec.shape == (1, C_OUT, 65, 65)
    assert jnp.allclose(out_spec, ref_spec, atol=1e-4, rtol=1e-4)

    print("KERNEL_OK")
</pallas_src>

<mosaic_0001>
module attributes {stable_mosaic.version = 11 : i64} {
  func.func @_fused_kernel(%arg0: i32, %arg1: i32, %arg2: memref<1x1x256xf32, #tpu.memory_space<vmem>>, %arg3: memref<128x1xf32, #tpu.memory_space<vmem>>, %arg4: memref<128x1xf32, #tpu.memory_space<vmem>>, %arg5: memref<128x128xf32, #tpu.memory_space<vmem>>, %arg6: memref<128x1xf32, #tpu.memory_space<vmem>>, %arg7: memref<1x128x256xf32, #tpu.memory_space<vmem>>) attributes {dimension_semantics = [#tpu.dimension_semantics<parallel>, #tpu.dimension_semantics<parallel>], iteration_bounds = array<i64: 2, 1>, scalar_prefetch = 0 : i64, scratch_operands = 0 : i64, tpu.core_type = #tpu.core_type<tc>, window_params = [{transform_indices = @transform_0, window_bounds = array<i64: 1, 1, 256>}, {pipeline_mode = #tpu.pipeline_mode<synchronous>, transform_indices = @transform_1, window_bounds = array<i64: 128, 1>}, {pipeline_mode = #tpu.pipeline_mode<synchronous>, transform_indices = @transform_2, window_bounds = array<i64: 128, 1>}, {pipeline_mode = #tpu.pipeline_mode<synchronous>, transform_indices = @transform_3, window_bounds = array<i64: 128, 128>}, {pipeline_mode = #tpu.pipeline_mode<synchronous>, transform_indices = @transform_4, window_bounds = array<i64: 128, 1>}, {transform_indices = @transform_5, window_bounds = array<i64: 1, 128, 256>}]} {
    %c0 = arith.constant 0 : index
    %c0_0 = arith.constant 0 : index
    %c0_1 = arith.constant 0 : index
    %0 = vector.load %arg2[%c0, %c0_0, %c0_1] : memref<1x1x256xf32, #tpu.memory_space<vmem>>, vector<1x1x256xf32>
    %1 = vector.shape_cast %0 : vector<1x1x256xf32> to vector<1x256xf32>
    %c0_2 = arith.constant 0 : index
    %c0_3 = arith.constant 0 : index
    %2 = vector.load %arg3[%c0_2, %c0_3] : memref<128x1xf32, #tpu.memory_space<vmem>>, vector<128x1xf32>
    %3 = vector.broadcast %2 : vector<128x1xf32> to vector<128x256xf32>
    %4 = vector.broadcast %1 : vector<1x256xf32> to vector<128x256xf32>
    %5 = arith.mulf %3, %4 : vector<128x256xf32>
    %c0_4 = arith.constant 0 : index
    %c0_5 = arith.constant 0 : index
    %6 = vector.load %arg4[%c0_4, %c0_5] : memref<128x1xf32, #tpu.memory_space<vmem>>, vector<128x1xf32>
    %7 = vector.broadcast %6 : vector<128x1xf32> to vector<128x256xf32>
    %8 = arith.addf %5, %7 : vector<128x256xf32>
    %cst = arith.constant 0.000000e+00 : f32
    %9 = vector.broadcast %cst : f32 to vector<128x256xf32>
    %10 = arith.subf %9, %8 : vector<128x256xf32>
    %cst_6 = arith.constant 0.000000e+00 : f32
    %11 = vector.broadcast %cst_6 : f32 to vector<128x256xf32>
    %12 = arith.maximumf %10, %11 : vector<128x256xf32>
    %c0_7 = arith.constant 0 : index
    %c0_8 = arith.constant 0 : index
    %13 = vector.load %arg5[%c0_7, %c0_8] : memref<128x128xf32, #tpu.memory_space<vmem>>, vector<128x128xf32>
    %cst_9 = arith.constant dense<0.000000e+00> : vector<128x256xf32>
    %14 = tpu.matmul %13, %12, %cst_9 {dimension_numbers = #tpu.dot_dimension_numbers<[1], [0], [0], [1], [0, 0, 1, 1], [], []>} : vector<128x128xf32>, vector<128x256xf32>, vector<128x256xf32> -> vector<128x256xf32>
    %c0_10 = arith.constant 0 : index
    %c0_11 = arith.constant 0 : index
    %15 = vector.load %arg6[%c0_10, %c0_11] : memref<128x1xf32, #tpu.memory_space<vmem>>, vector<128x1xf32>
    %16 = vector.broadcast %15 : vector<128x1xf32> to vector<128x256xf32>
    %17 = arith.addf %14, %16 : vector<128x256xf32>
    %cst_12 = arith.constant 0.000000e+00 : f32
    %18 = vector.broadcast %cst_12 : f32 to vector<128x256xf32>
    %19 = arith.maximumf %17, %18 : vector<128x256xf32>
    %c0_13 = arith.constant 0 : index
    %c0_14 = arith.constant 0 : index
    %c0_15 = arith.constant 0 : index
    %20 = vector.load %arg7[%c0_13, %c0_14, %c0_15] : memref<1x128x256xf32, #tpu.memory_space<vmem>>, vector<1x128x256xf32>
    %21 = vector.shape_cast %20 : vector<1x128x256xf32> to vector<128x256xf32>
    %22 = vector.shape_cast %19 : vector<128x256xf32> to vector<1x128x256xf32>
    tpu.vector_store %arg7[%c0_13, %c0_14, %c0_15], %22 {strides = array<i32>} : memref<1x128x256xf32, #tpu.memory_space<vmem>>, vector<1x128x256xf32>,
    return
  }
  func.func @transform_0(%arg0: i32, %arg1: i32) -> (i32, i32, i32) {
    %c0_i32 = arith.constant 0 : i32
    %c0_i32_0 = arith.constant 0 : i32
    return %arg0, %c0_i32, %arg1 : i32, i32, i32
  }
  func.func @transform_1(%arg0: i32, %arg1: i32) -> (i32, i32) {
    %c0_i32 = arith.constant 0 : i32
    %c0_i32_0 = arith.constant 0 : i32
    %c0_i32_1 = arith.constant 0 : i32
    return %c0_i32, %c0_i32_0 : i32, i32
  }
  func.func @transform_2(%arg0: i32, %arg1: i32) -> (i32, i32) {
    %c0_i32 = arith.constant 0 : i32
    %c0_i32_0 = arith.constant 0 : i32
    %c0_i32_1 = arith.constant 0 : i32
    return %c0_i32, %c0_i32_0 : i32, i32
  }
  func.func @transform_3(%arg0: i32, %arg1: i32) -> (i32, i32) {
    %c0_i32 = arith.constant 0 : i32
    %c0_i32_0 = arith.constant 0 : i32
    %c0_i32_1 = arith.constant 0 : i32
    return %c0_i32, %c0_i32_0 : i32, i32
  }
  func.func @transform_4(%arg0: i32, %arg1: i32) -> (i32, i32) {
    %c0_i32 = arith.constant 0 : i32
    %c0_i32_0 = arith.constant 0 : i32
    %c0_i32_1 = arith.constant 0 : i32
    return %c0_i32, %c0_i32_0 : i32, i32
  }
  func.func @transform_5(%arg0: i32, %arg1: i32) -> (i32, i32, i32) {
    %c0_i32 = arith.constant 0 : i32
    %c0_i32_0 = arith.constant 0 : i32
    return %arg0, %c0_i32, %arg1 : i32, i32, i32
  }
}

</mosaic_0001>

<llo_original>
// kernel: tpu_custom_call.1
$region0: #{tpu_custom_call.1}
  #allocation0 [shape = 'u32[]', space=smem, size = 0x4, offset = 0x4, fixed_abs, tag = 'smem constant byte address 0x4 - core index']
  #allocation1 [shape = 'u32[72,128]{1,0:T(1,128)}', space=vmem, size = 0x9000, scoped, tag = 'internal scratch']
  %s0 = inlined_call_operand.vmem [shape: f32[2,1,256], index: 0, kind: input, shape index: {}]
  %s1 = inlined_call_operand.vmem [shape: f32[128,1], index: 1, kind: input, shape index: {}]
  %s2 = inlined_call_operand.vmem [shape: f32[128,1], index: 2, kind: input, shape index: {}]
  %s3 = inlined_call_operand.vmem [shape: f32[128,128], index: 3, kind: input, shape index: {}]
  %s4 = inlined_call_operand.vmem [shape: f32[128,1], index: 4, kind: input, shape index: {}]
  %s5 = inlined_call_operand.hbm [shape: f32[2,128,256], index: 5, kind: output, shape index: {}]
  %s6 = sld [smem:[#allocation0]]
  $region53: #{tpu_custom_call.1} parent=0
    _
  %s8 = ssub.s32 1, %s6
  %s9 = scalar_select 0, %s8, %s6
  $region1: #{tpu_custom_call.1} parent=0
    #allocation2 [shape = 'u8[262144]{0}', space=vmem, size = 0x40000, scoped, tag = 'output window, operand 0']
    #allocation3 [shape = 's32[2]{0}', space=sflag, size = 0x8, scoped, tag = 'scoped memory for tpu_custom_call.1']
    %10 = vsyncpa [#allocation3], 0
    %s11 = scalar_lea.sflag [#allocation3], 1
    %12 = vsyncpa %s11, 0
    loop: start=0, step=1, limit=4
    $region2: #{tpu_custom_call.1} parent=1 // loop_pre_header
      _
    $region3: #{tpu_custom_call.1} parent=1 // loop_header
      %s14 = sphi 0, %s18
      %p15 = scmp.ge.s32.totalorder %s14, 4
      %s21 = sphi 0, %s33
      %s22 = sphi 0, %s29
      %s23 = sphi 0, %s21
      %s24 = sphi 0, %s22
      %s25 = sphi 0, %s23
      %s26 = sphi 0, %s24
      %s38 = sphi 0, %s40
      %s41 = sphi 0, %s38
      %s42 = sphi 0, %s41
      %s58 = sphi 0, %s42
      %s62 = sphi 0, %s62
      %s64 = sphi 0, %s62
      %s65 = sphi 0, %s64
      %s79 = sphi 0, %s65
      %s83 = sphi 0, %s83
      %s85 = sphi 0, %s83
      %s86 = sphi 0, %s85
      %s100 = sphi 0, %s86
      %s104 = sphi 0, %s104
      %s106 = sphi 0, %s104
      %s107 = sphi 0, %s106
      %s121 = sphi 0, %s107
      %s125 = sphi 0, %s125
      %s127 = sphi 0, %s125
      %s128 = sphi 0, %s127
      %s142 = sphi 0, %s128
      %s150 = sphi 0, %s152
      %s153 = sphi 0, %s150
      %s154 = sphi 0, %s153
      %s170 = sphi 0, %s154
    $region4: #{tpu_custom_call.1} parent=1 // loop_header_branch
      %17 = sbr.rel (%p15) target = $region8
    $region5: #{tpu_custom_call.1} parent=1 // loop_body
      %s19 = ssub.s32 %s14, 1
      %s20 = ssub.s32 %s14, 2
      %s27 = sadd.s32 1, %s22
      %p28 = scmp.ge.s32.totalorder %s27, 1
      %s29 = scalar_select %p28, 0, %s27
      %s30 = sadd.s32 1, %s21
      %s31 = scalar_select %p28, %s30, %s21
      %p32 = scmp.ge.s32.totalorder %s31, 2
      %s33 = scalar_select %p32, 0, %s31
      %s34 = ssub.s32 %s21, %s33
      %s35 = ssub.s32 %s22, %s29
      %s36 = sor.u32 %s34, %s35
      %p37 = scmp.eq.s32.totalorder %s36, 0
      %s39 = sadd.s32 %s38, 1
      %s40 = scalar_select %p37, %s38, %s39
      %p43 = pneg %p37
      %p44 = scmp.eq.s32.totalorder %s14, 1
      %p45 = por %p43, %p44
      %p46 = scmp.ne.s32.totalorder %s38, %s41
      %p47 = scmp.eq.s32.totalorder %s14, 0
      %p48 = por %p46, %p47
      %p49 = scmp.ne.s32.totalorder %s38, %s41
      %p50 = scmp.eq.s32.totalorder %s19, 1
      %p51 = por %p49, %p50
      %p52 = scmp.ne.s32.totalorder %s41, %s42
      %p53 = scmp.eq.s32.totalorder %s19, 0
      %p54 = por %p52, %p53
      %p55 = scmp.ne.s32.totalorder %s41, %s42
      %p56 = scmp.eq.s32.totalorder %s20, 1
      %p57 = por %p55, %p56
      %p59 = scmp.ne.s32.totalorder %s42, %s58
      %p60 = scmp.eq.s32.totalorder %s20, 0
      %p61 = por %p59, %p60
      %s63 = sadd.s32 %s62, 1
      %p66 = scmp.eq.s32.totalorder %s14, 1
      %p67 = scmp.ne.s32.totalorder %s62, %s64
      %p68 = scmp.eq.s32.totalorder %s14, 0
      %p69 = por %p67, %p68
      %p70 = scmp.ne.s32.totalorder %s62, %s64
      %p71 = scmp.eq.s32.totalorder %s19, 1
      %p72 = por %p70, %p71
      %p73 = scmp.ne.s32.totalorder %s64, %s65
      %p74 = scmp.eq.s32.totalorder %s19, 0
      %p75 = por %p73, %p74
      %p76 = scmp.ne.s32.totalorder %s64, %s65
      %p77 = scmp.eq.s32.totalorder %s20, 1
      %p78 = por %p76, %p77
      %p80 = scmp.ne.s32.totalorder %s65, %s79
      %p81 = scmp.eq.s32.totalorder %s20, 0
      %p82 = por %p80, %p81
      %s84 = sadd.s32 %s83, 1
      %p87 = scmp.eq.s32.totalorder %s14, 1
      %p88 = scmp.ne.s32.totalorder %s83, %s85
      %p89 = scmp.eq.s32.totalorder %s14, 0
      %p90 = por %p88, %p89
      %p91 = scmp.ne.s32.totalorder %s83, %s85
      %p92 = scmp.eq.s32.totalorder %s19, 1
      %p93 = por %p91, %p92
      %p94 = scmp.ne.s32.totalorder %s85, %s86
      %p95 = scmp.eq.s32.totalorder %s19, 0
      %p96 = por %p94, %p95
      %p97 = scmp.ne.s32.totalorder %s85, %s86
      %p98 = scmp.eq.s32.totalorder %s20, 1
      %p99 = por %p97, %p98
      %p101 = scmp.ne.s32.totalorder %s86, %s100
      %p102 = scmp.eq.s32.totalorder %s20, 0
      %p103 = por %p101, %p102
      %s105 = sadd.s32 %s104, 1
      %p108 = scmp.eq.s32.totalorder %s14, 1
      %p109 = scmp.ne.s32.totalorder %s104, %s106
      %p110 = scmp.eq.s32.totalorder %s14, 0
      %p111 = por %p109, %p110
      %p112 = scmp.ne.s32.totalorder %s104, %s106
      %p113 = scmp.eq.s32.totalorder %s19, 1
      %p114 = por %p112, %p113
      %p115 = scmp.ne.s32.totalorder %s106, %s107
      %p116 = scmp.eq.s32.totalorder %s19, 0
      %p117 = por %p115, %p116
      %p118 = scmp.ne.s32.totalorder %s106, %s107
      %p119 = scmp.eq.s32.totalorder %s20, 1
      %p120 = por %p118, %p119
      %p122 = scmp.ne.s32.totalorder %s107, %s121
      %p123 = scmp.eq.s32.totalorder %s20, 0
      %p124 = por %p122, %p123
      %s126 = sadd.s32 %s125, 1
      %p129 = scmp.eq.s32.totalorder %s14, 1
      %p130 = scmp.ne.s32.totalorder %s125, %s127
      %p131 = scmp.eq.s32.totalorder %s14, 0
      %p132 = por %p130, %p131
      %p133 = scmp.ne.s32.totalorder %s125, %s127
      %p134 = scmp.eq.s32.totalorder %s19, 1
      %p135 = por %p133, %p134
      %p136 = scmp.ne.s32.totalorder %s127, %s128
      %p137 = scmp.eq.s32.totalorder %s19, 0
      %p138 = por %p136, %p137
      %p139 = scmp.ne.s32.totalorder %s127, %s128
      %p140 = scmp.eq.s32.totalorder %s20, 1
      %p141 = por %p139, %p140
      %p143 = scmp.ne.s32.totalorder %s128, %s142
      %p144 = scmp.eq.s32.totalorder %s20, 0
      %p145 = por %p143, %p144
      %s146 = ssub.s32 %s21, %s33
      %s147 = ssub.s32 %s22, %s29
      %s148 = sor.u32 %s146, %s147
      %p149 = scmp.eq.s32.totalorder %s148, 0
      %s151 = sadd.s32 %s150, 1
      %s152 = scalar_select %p149, %s150, %s151
      %p155 = pneg %p149
      %p156 = scmp.eq.s32.totalorder %s14, 1
      %p157 = por %p155, %p156
      %p158 = scmp.ne.s32.totalorder %s150, %s153
      %p159 = scmp.eq.s32.totalorder %s14, 0
      %p160 = por %p158, %p159
      %p161 = scmp.ne.s32.totalorder %s150, %s153
      %p162 = scmp.eq.s32.totalorder %s19, 1
      %p163 = por %p161, %p162
      %p164 = scmp.ne.s32.totalorder %s153, %s154
      %p165 = scmp.eq.s32.totalorder %s19, 0
      %p166 = por %p164, %p165
      %p167 = scmp.ne.s32.totalorder %s153, %s154
      %p168 = scmp.eq.s32.totalorder %s20, 1
      %p169 = por %p167, %p168
      %p171 = scmp.ne.s32.totalorder %s154, %s170
      %p172 = scmp.eq.s32.totalorder %s20, 0
      %p173 = por %p171, %p172
      %p174 = scmp.le.s32.totalorder 1, %s14
      %p175 = scmp.lt.s32.totalorder %s14, 3
      %p176 = pnand %p174, %p175
      %p177 = pneg %p176
      // Predicated region
      $region9: #{tpu_custom_call.1} parent=5 // pred_check
        _
      $region10: #{tpu_custom_call.1} parent=5 // pred_check_branch
        %179 = sbr.rel (%p176) target = $region12
      $region11: #{tpu_custom_call.1} parent=5 // pred_region
        %s180 = ssub.s32 %s14, 1
        // Predicated region
        $region13: #{tpu_custom_call.1} parent=11 // pred_check
          %p181 = pneg %p75
        $region14: #{tpu_custom_call.1} parent=11 // pred_check_branch
          %183 = sbr.rel (%p181) target = $region16
        $region15: #{tpu_custom_call.1} parent=11 // pred_region
          _
        $region16: #{tpu_custom_call.1} parent=11 // pred_fallthru
          _
        // Predicated region
        $region17: #{tpu_custom_call.1} parent=11 // pred_check
          %p184 = pneg %p96
        $region18: #{tpu_custom_call.1} parent=11 // pred_check_branch
          %186 = sbr.rel (%p184) target = $region20
        $region19: #{tpu_custom_call.1} parent=11 // pred_region
          _
        $region20: #{tpu_custom_call.1} parent=11 // pred_fallthru
          _
        // Predicated region
        $region21: #{tpu_custom_call.1} parent=11 // pred_check
          %p187 = pneg %p117
        $region22: #{tpu_custom_call.1} parent=11 // pred_check_branch
          %189 = sbr.rel (%p187) target = $region24
        $region23: #{tpu_custom_call.1} parent=11 // pred_region
          _
        $region24: #{tpu_custom_call.1} parent=11 // pred_fallthru
          _
        // Predicated region
        $region25: #{tpu_custom_call.1} parent=11 // pred_check
          %p190 = pneg %p138
        $region26: #{tpu_custom_call.1} parent=11 // pred_check_branch
          %192 = sbr.rel (%p190) target = $region28
        $region27: #{tpu_custom_call.1} parent=11 // pred_region
          _
        $region28: #{tpu_custom_call.1} parent=11 // pred_fallthru
          _
      $region12: #{tpu_custom_call.1} parent=5 // pred_fallthru
        _
      %p193 = scmp.lt.s32.totalorder %s14, 2
      // Predicated region
      $region29: #{tpu_custom_call.1} parent=5 // pred_check
        %p194 = pneg %p193
      $region30: #{tpu_custom_call.1} parent=5 // pred_check_branch
        %196 = sbr.rel (%p194) target = $region32
      $region31: #{tpu_custom_call.1} parent=5 // pred_region
        // Predicated region
        $region33: #{tpu_custom_call.1} parent=31 // pred_check
          %p197 = pneg %p48
        $region34: #{tpu_custom_call.1} parent=31 // pred_check_branch
          %199 = sbr.rel (%p197) target = $region36
        $region35: #{tpu_custom_call.1} parent=31 // pred_region
          %s200 = smul.u32 2, %s22
          %p201 = scmp.lt.s32.totalorder %s21, 1
          %s202 = scalar_select %p201, %s21, 1
          %p203 = scmp.lt.s32.totalorder %s200, 1
          %s204 = scalar_select %p203, %s200, 1
          %s205 = smul.addr %s202, 2
          %s206 = sadd.s32 %s204, %s205
          %s207 = scalar_lea.vmem %s0, %s206
          %s208 = smul.u32 2, %s22
        $region36: #{tpu_custom_call.1} parent=31 // pred_fallthru
          _
      $region32: #{tpu_custom_call.1} parent=5 // pred_fallthru
        _
      %p209 = scmp.le.s32.totalorder 1, %s14
      %p210 = scmp.lt.s32.totalorder %s14, 3
      %p211 = pnand %p209, %p210
      %p212 = pneg %p211
      // Predicated region
      $region37: #{tpu_custom_call.1} parent=5 // pred_check
        _
      $region38: #{tpu_custom_call.1} parent=5 // pred_check_branch
        %214 = sbr.rel (%p211) target = $region40
      $region39: #{tpu_custom_call.1} parent=5 // pred_region
        %s215 = ssub.s32 %s14, 1
        %s216 = smul.u32 2, %s24
        %p217 = scmp.lt.s32.totalorder %s23, 1
        %s218 = scalar_select %p217, %s23, 1
        %p219 = scmp.lt.s32.totalorder %s216, 1
        %s220 = scalar_select %p219, %s216, 1
        %s221 = smul.addr %s218, 2
        %s222 = sadd.s32 %s220, %s221
        %s223 = scalar_lea.vmem %s0, %s222
        %p224 = pneg %p54
        %p225 = pneg %p51
        %p226 = pneg %p75
        %p227 = pneg %p72
        %p228 = pneg %p96
        %p229 = pneg %p93
        %p230 = pneg %p117
        %p231 = pneg %p114
        %p232 = pneg %p138
        %p233 = pneg %p135
        %p234 = pneg %p166
        %p235 = pneg %p163
        %s236 = sand.u32 %s153, 1
        %s237 = scalar_lea.sflag [#allocation3], %s236
        %s238 = sand.u32 %s153, 1
        %s239 = smul.addr %s238, 256
        %s240 = scalar_lea.vmem [#allocation2], %s239
        %s241 = smul.u32 2, %s24
        %p242 = scmp.lt.s32.totalorder %s23, 1
        %s243 = scalar_select %p242, %s23, 1
        %p244 = scmp.lt.s32.totalorder %s241, 1
        %s245 = scalar_select %p244, %s241, 1
        %s246 = smul.addr %s243, 2
        %s247 = sadd.s32 %s245, %s246
        %s248 = scalar_lea.vmem %s0, %s247
        %s249 = smul.u32 2, %s24
        %s250 = smul.u32 2, %s24
        %v251 = vld [vmem:[%s248] sm:$0x3]
        %v252 = vld [vmem:[%s1] sm:$0xff]
        %v253 = vld [vmem:[%s1 + $0x8] sm:$0xff]
        %v254 = vld [vmem:[%s1 + $0x10] sm:$0xff]
        %v255 = vld [vmem:[%s1 + $0x18] sm:$0xff]
        %v256 = vld [vmem:[%s1 + $0x20] sm:$0xff]
        %v257 = vld [vmem:[%s1 + $0x28] sm:$0xff]
        %v258 = vld [vmem:[%s1 + $0x30] sm:$0xff]
        %v259 = vld [vmem:[%s1 + $0x38] sm:$0xff]
        %v260 = vld [vmem:[%s1 + $0x40] sm:$0xff]
        %v261 = vld [vmem:[%s1 + $0x48] sm:$0xff]
        %v262 = vld [vmem:[%s1 + $0x50] sm:$0xff]
        %v263 = vld [vmem:[%s1 + $0x58] sm:$0xff]
        %v264 = vld [vmem:[%s1 + $0x60] sm:$0xff]
        %v265 = vld [vmem:[%s1 + $0x68] sm:$0xff]
        %v266 = vld [vmem:[%s1 + $0x70] sm:$0xff]
        %v267 = vld [vmem:[%s1 + $0x78] sm:$0xff]
        %269 = vset.pattern.permute.xlu0 0
        %270 = vperm.xlu0 %269, %v252
        %v271 = vpop.permute.xlu0 %270
        %274 = vset.pattern.permute.xlu0 0
        %275 = vperm.xlu0 %274, %v253
        %v276 = vpop.permute.xlu0 %275
        %279 = vset.pattern.permute.xlu0 0
        %280 = vperm.xlu0 %279, %v254
        %v281 = vpop.permute.xlu0 %280
        %284 = vset.pattern.permute.xlu0 0
        %285 = vperm.xlu0 %284, %v255
        %v286 = vpop.permute.xlu0 %285
        %289 = vset.pattern.permute.xlu0 0
        %290 = vperm.xlu0 %289, %v256
        %v291 = vpop.permute.xlu0 %290
        %294 = vset.pattern.permute.xlu0 0
        %295 = vperm.xlu0 %294, %v257
        %v296 = vpop.permute.xlu0 %295
        %299 = vset.pattern.permute.xlu0 0
        %300 = vperm.xlu0 %299, %v258
        %v301 = vpop.permute.xlu0 %300
        %304 = vset.pattern.permute.xlu0 0
        %305 = vperm.xlu0 %304, %v259
        %v306 = vpop.permute.xlu0 %305
        %309 = vset.pattern.permute.xlu0 0
        %310 = vperm.xlu0 %309, %v260
        %v311 = vpop.permute.xlu0 %310
        %314 = vset.pattern.permute.xlu0 0
        %315 = vperm.xlu0 %314, %v261
        %v316 = vpop.permute.xlu0 %315
        %319 = vset.pattern.permute.xlu0 0
        %320 = vperm.xlu0 %319, %v262
        %v321 = vpop.permute.xlu0 %320
        %324 = vset.pattern.permute.xlu0 0
        %325 = vperm.xlu0 %324, %v263
        %v326 = vpop.permute.xlu0 %325
        %329 = vset.pattern.permute.xlu0 0
        %330 = vperm.xlu0 %329, %v264
        %v331 = vpop.permute.xlu0 %330
        %334 = vset.pattern.permute.xlu0 0
        %335 = vperm.xlu0 %334, %v265
        %v336 = vpop.permute.xlu0 %335
        %339 = vset.pattern.permute.xlu0 0
        %340 = vperm.xlu0 %339, %v266
        %v341 = vpop.permute.xlu0 %340
        %344 = vset.pattern.permute.xlu0 0
        %345 = vperm.xlu0 %344, %v267
        %v346 = vpop.permute.xlu0 %345
        %v349 = vperm.slane %v251, 0
        %v350 = vperm.slane %v251, 1
        %v353 = vmul.f32 %v271, %v349
        %v354 = vmul.f32 %v271, %v350
        %v355 = vmul.f32 %v276, %v349
        %v356 = vmul.f32 %v276, %v350
        %v357 = vmul.f32 %v281, %v349
        %v358 = vmul.f32 %v281, %v350
        %v359 = vmul.f32 %v286, %v349
        %v360 = vmul.f32 %v286, %v350
        %v361 = vmul.f32 %v291, %v349
        %v362 = vmul.f32 %v291, %v350
        %v363 = vmul.f32 %v296, %v349
        %v364 = vmul.f32 %v296, %v350
        %v365 = vmul.f32 %v301, %v349
        %v366 = vmul.f32 %v301, %v350
        %v367 = vmul.f32 %v306, %v349
        %v368 = vmul.f32 %v306, %v350
        %v369 = vmul.f32 %v311, %v349
        %v370 = vmul.f32 %v311, %v350
        %v371 = vmul.f32 %v316, %v349
        %v372 = vmul.f32 %v316, %v350
        %v373 = vmul.f32 %v321, %v349
        %v374 = vmul.f32 %v321, %v350
        %v375 = vmul.f32 %v326, %v349
        %v376 = vmul.f32 %v326, %v350
        %v377 = vmul.f32 %v331, %v349
        %v378 = vmul.f32 %v331, %v350
        %v379 = vmul.f32 %v336, %v349
        %v380 = vmul.f32 %v336, %v350
        %v381 = vmul.f32 %v341, %v349
        %v382 = vmul.f32 %v341, %v350
        %v383 = vmul.f32 %v346, %v349
        %v384 = vmul.f32 %v346, %v350
        %v385 = vld [vmem:[%s2] sm:$0xff]
        %v386 = vld [vmem:[%s2 + $0x8] sm:$0xff]
        %v387 = vld [vmem:[%s2 + $0x10] sm:$0xff]
        %v388 = vld [vmem:[%s2 + $0x18] sm:$0xff]
        %v389 = vld [vmem:[%s2 + $0x20] sm:$0xff]
        %v390 = vld [vmem:[%s2 + $0x28] sm:$0xff]
        %v391 = vld [vmem:[%s2 + $0x30] sm:$0xff]
        %v392 = vld [vmem:[%s2 + $0x38] sm:$0xff]
        %v393 = vld [vmem:[%s2 + $0x40] sm:$0xff]
        %v394 = vld [vmem:[%s2 + $0x48] sm:$0xff]
        %v395 = vld [vmem:[%s2 + $0x50] sm:$0xff]
        %v396 = vld [vmem:[%s2 + $0x58] sm:$0xff]
        %v397 = vld [vmem:[%s2 + $0x60] sm:$0xff]
        %v398 = vld [vmem:[%s2 + $0x68] sm:$0xff]
        %v399 = vld [vmem:[%s2 + $0x70] sm:$0xff]
        %v400 = vld [vmem:[%s2 + $0x78] sm:$0xff]
        %402 = vset.pattern.permute.xlu0 0
        %403 = vperm.xlu0 %402, %v385
        %v404 = vpop.permute.xlu0 %403
        %407 = vset.pattern.permute.xlu0 0
        %408 = vperm.xlu0 %407, %v386
        %v409 = vpop.permute.xlu0 %408
        %412 = vset.pattern.permute.xlu0 0
        %413 = vperm.xlu0 %412, %v387
        %v414 = vpop.permute.xlu0 %413
        %417 = vset.pattern.permute.xlu0 0
        %418 = vperm.xlu0 %417, %v388
        %v419 = vpop.permute.xlu0 %418
        %422 = vset.pattern.permute.xlu0 0
        %423 = vperm.xlu0 %422, %v389
        %v424 = vpop.permute.xlu0 %423
        %427 = vset.pattern.permute.xlu0 0
        %428 = vperm.xlu0 %427, %v390
        %v429 = vpop.permute.xlu0 %428
        %432 = vset.pattern.permute.xlu0 0
        %433 = vperm.xlu0 %432, %v391
        %v434 = vpop.permute.xlu0 %433
        %437 = vset.pattern.permute.xlu0 0
        %438 = vperm.xlu0 %437, %v392
        %v439 = vpop.permute.xlu0 %438
        %442 = vset.pattern.permute.xlu0 0
        %443 = vperm.xlu0 %442, %v393
        %v444 = vpop.permute.xlu0 %443
        %447 = vset.pattern.permute.xlu0 0
        %448 = vperm.xlu0 %447, %v394
        %v449 = vpop.permute.xlu0 %448
        %452 = vset.pattern.permute.xlu0 0
        %453 = vperm.xlu0 %452, %v395
        %v454 = vpop.permute.xlu0 %453
        %457 = vset.pattern.permute.xlu0 0
        %458 = vperm.xlu0 %457, %v396
        %v459 = vpop.permute.xlu0 %458
        %462 = vset.pattern.permute.xlu0 0
        %463 = vperm.xlu0 %462, %v397
        %v464 = vpop.permute.xlu0 %463
        %467 = vset.pattern.permute.xlu0 0
        %468 = vperm.xlu0 %467, %v398
        %v469 = vpop.permute.xlu0 %468
        %472 = vset.pattern.permute.xlu0 0
        %473 = vperm.xlu0 %472, %v399
        %v474 = vpop.permute.xlu0 %473
        %477 = vset.pattern.permute.xlu0 0
        %478 = vperm.xlu0 %477, %v400
        %v479 = vpop.permute.xlu0 %478
        %v481 = vadd.f32 %v353, %v404
        %v482 = vadd.f32 %v354, %v404
        %v483 = vadd.f32 %v355, %v409
        %v484 = vadd.f32 %v356, %v409
        %v485 = vadd.f32 %v357, %v414
        %v486 = vadd.f32 %v358, %v414
        %v487 = vadd.f32 %v359, %v419
        %v488 = vadd.f32 %v360, %v419
        %v489 = vadd.f32 %v361, %v424
        %v490 = vadd.f32 %v362, %v424
        %v491 = vadd.f32 %v363, %v429
        %v492 = vadd.f32 %v364, %v429
        %v493 = vadd.f32 %v365, %v434
        %v494 = vadd.f32 %v366, %v434
        %v495 = vadd.f32 %v367, %v439
        %v496 = vadd.f32 %v368, %v439
        %v497 = vadd.f32 %v369, %v444
        %v498 = vadd.f32 %v370, %v444
        %v499 = vadd.f32 %v371, %v449
        %v500 = vadd.f32 %v372, %v449
        %v501 = vadd.f32 %v373, %v454
        %v502 = vadd.f32 %v374, %v454
        %v503 = vadd.f32 %v375, %v459
        %v504 = vadd.f32 %v376, %v459
        %v505 = vadd.f32 %v377, %v464
        %v506 = vadd.f32 %v378, %v464
        %v507 = vadd.f32 %v379, %v469
        %v508 = vadd.f32 %v380, %v469
        %v509 = vadd.f32 %v381, %v474
        %v510 = vadd.f32 %v382, %v474
        %v511 = vadd.f32 %v383, %v479
        %v512 = vadd.f32 %v384, %v479
        %v513 = vsub.f32 0.0, %v481
        %v514 = vsub.f32 0.0, %v482
        %v515 = vsub.f32 0.0, %v483
        %v516 = vsub.f32 0.0, %v484
        %v517 = vsub.f32 0.0, %v485
        %v518 = vsub.f32 0.0, %v486
        %v519 = vsub.f32 0.0, %v487
        %v520 = vsub.f32 0.0, %v488
        %v521 = vsub.f32 0.0, %v489
        %v522 = vsub.f32 0.0, %v490
        %v523 = vsub.f32 0.0, %v491
        %v524 = vsub.f32 0.0, %v492
        %v525 = vsub.f32 0.0, %v493
        %v526 = vsub.f32 0.0, %v494
        %v527 = vsub.f32 0.0, %v495
        %v528 = vsub.f32 0.0, %v496
        %v529 = vsub.f32 0.0, %v497
        %v530 = vsub.f32 0.0, %v498
        %v531 = vsub.f32 0.0, %v499
        %v532 = vsub.f32 0.0, %v500
        %v533 = vsub.f32 0.0, %v501
        %v534 = vsub.f32 0.0, %v502
        %v535 = vsub.f32 0.0, %v503
        %v536 = vsub.f32 0.0, %v504
        %v537 = vsub.f32 0.0, %v505
        %v538 = vsub.f32 0.0, %v506
        %v539 = vsub.f32 0.0, %v507
        %v540 = vsub.f32 0.0, %v508
        %v541 = vsub.f32 0.0, %v509
        %v542 = vsub.f32 0.0, %v510
        %v543 = vsub.f32 0.0, %v511
        %v544 = vsub.f32 0.0, %v512
        %v545 = vmax.f32 %v513, 0.0
        %v546 = vmax.f32 %v514, 0.0
        %v547 = vmax.f32 %v515, 0.0
        %v548 = vmax.f32 %v516, 0.0
        %v549 = vmax.f32 %v517, 0.0
        %v550 = vmax.f32 %v518, 0.0
        %v551 = vmax.f32 %v519, 0.0
        %v552 = vmax.f32 %v520, 0.0
        %v553 = vmax.f32 %v521, 0.0
        %v554 = vmax.f32 %v522, 0.0
        %v555 = vmax.f32 %v523, 0.0
        %v556 = vmax.f32 %v524, 0.0
        %v557 = vmax.f32 %v525, 0.0
        %v558 = vmax.f32 %v526, 0.0
        %v559 = vmax.f32 %v527, 0.0
        %v560 = vmax.f32 %v528, 0.0
        %v561 = vmax.f32 %v529, 0.0
        %v562 = vmax.f32 %v530, 0.0
        %v563 = vmax.f32 %v531, 0.0
        %v564 = vmax.f32 %v532, 0.0
        %v565 = vmax.f32 %v533, 0.0
        %v566 = vmax.f32 %v534, 0.0
        %v567 = vmax.f32 %v535, 0.0
        %v568 = vmax.f32 %v536, 0.0
        %v569 = vmax.f32 %v537, 0.0
        %v570 = vmax.f32 %v538, 0.0
        %v571 = vmax.f32 %v539, 0.0
        %v572 = vmax.f32 %v540, 0.0
        %v573 = vmax.f32 %v541, 0.0
        %v574 = vmax.f32 %v542, 0.0
        %v575 = vmax.f32 %v543, 0.0
        %v576 = vmax.f32 %v544, 0.0
        %v577 = vld [vmem:[%s3] sm:$0xff]
        %v578 = vld [vmem:[%s3 + $0x8] sm:$0xff]
        %v579 = vld [vmem:[%s3 + $0x10] sm:$0xff]
        %v580 = vld [vmem:[%s3 + $0x18] sm:$0xff]
        %v581 = vld [vmem:[%s3 + $0x20] sm:$0xff]
        %v582 = vld [vmem:[%s3 + $0x28] sm:$0xff]
        %v583 = vld [vmem:[%s3 + $0x30] sm:$0xff]
        %v584 = vld [vmem:[%s3 + $0x38] sm:$0xff]
        %v585 = vld [vmem:[%s3 + $0x40] sm:$0xff]
        %v586 = vld [vmem:[%s3 + $0x48] sm:$0xff]
        %v587 = vld [vmem:[%s3 + $0x50] sm:$0xff]
        %v588 = vld [vmem:[%s3 + $0x58] sm:$0xff]
        %v589 = vld [vmem:[%s3 + $0x60] sm:$0xff]
        %v590 = vld [vmem:[%s3 + $0x68] sm:$0xff]
        %v591 = vld [vmem:[%s3 + $0x70] sm:$0xff]
        %v592 = vld [vmem:[%s3 + $0x78] sm:$0xff]
        %v593 = vld [vmem:[%s4] sm:$0xff]
        %v594 = vld [vmem:[%s4 + $0x8] sm:$0xff]
        %v595 = vld [vmem:[%s4 + $0x10] sm:$0xff]
        %v596 = vld [vmem:[%s4 + $0x18] sm:$0xff]
        %v597 = vld [vmem:[%s4 + $0x20] sm:$0xff]
        %v598 = vld [vmem:[%s4 + $0x28] sm:$0xff]
        %v599 = vld [vmem:[%s4 + $0x30] sm:$0xff]
        %v600 = vld [vmem:[%s4 + $0x38] sm:$0xff]
        %v601 = vld [vmem:[%s4 + $0x40] sm:$0xff]
        %v602 = vld [vmem:[%s4 + $0x48] sm:$0xff]
        %v603 = vld [vmem:[%s4 + $0x50] sm:$0xff]
        %v604 = vld [vmem:[%s4 + $0x58] sm:$0xff]
        %v605 = vld [vmem:[%s4 + $0x60] sm:$0xff]
        %v606 = vld [vmem:[%s4 + $0x68] sm:$0xff]
        %v607 = vld [vmem:[%s4 + $0x70] sm:$0xff]
        %v608 = vld [vmem:[%s4 + $0x78] sm:$0xff]
        %610 = vset.pattern.permute.xlu0 0
        %611 = vperm.xlu0 %610, %v593
        %v612 = vpop.permute.xlu0 %611
        %615 = vset.pattern.permute.xlu0 0
        %616 = vperm.xlu0 %615, %v594
        %v617 = vpop.permute.xlu0 %616
        %620 = vset.pattern.permute.xlu0 0
        %621 = vperm.xlu0 %620, %v595
        %v622 = vpop.permute.xlu0 %621
        %625 = vset.pattern.permute.xlu0 0
        %626 = vperm.xlu0 %625, %v596
        %v627 = vpop.permute.xlu0 %626
        %630 = vset.pattern.permute.xlu0 0
        %631 = vperm.xlu0 %630, %v597
        %v632 = vpop.permute.xlu0 %631
        %635 = vset.pattern.permute.xlu0 0
        %636 = vperm.xlu0 %635, %v598
        %v637 = vpop.permute.xlu0 %636
        %640 = vset.pattern.permute.xlu0 0
        %641 = vperm.xlu0 %640, %v599
        %v642 = vpop.permute.xlu0 %641
        %645 = vset.pattern.permute.xlu0 0
        %646 = vperm.xlu0 %645, %v600
        %v647 = vpop.permute.xlu0 %646
        %650 = vset.pattern.permute.xlu0 0
        %651 = vperm.xlu0 %650, %v601
        %v652 = vpop.permute.xlu0 %651
        %655 = vset.pattern.permute.xlu0 0
        %656 = vperm.xlu0 %655, %v602
        %v657 = vpop.permute.xlu0 %656
        %660 = vset.pattern.permute.xlu0 0
        %661 = vperm.xlu0 %660, %v603
        %v662 = vpop.permute.xlu0 %661
        %665 = vset.pattern.permute.xlu0 0
        %666 = vperm.xlu0 %665, %v604
        %v667 = vpop.permute.xlu0 %666
        %670 = vset.pattern.permute.xlu0 0
        %671 = vperm.xlu0 %670, %v605
        %v672 = vpop.permute.xlu0 %671
        %675 = vset.pattern.permute.xlu0 0
        %676 = vperm.xlu0 %675, %v606
        %v677 = vpop.permute.xlu0 %676
        %680 = vset.pattern.permute.xlu0 0
        %681 = vperm.xlu0 %680, %v607
        %v682 = vpop.permute.xlu0 %681
        %685 = vset.pattern.permute.xlu0 0
        %686 = vperm.xlu0 %685, %v608
        %v687 = vpop.permute.xlu0 %686
        %689 = vmatpush.msra.mxu0 %v575
        %690 = vmatpush.msra.mxu0 %v573
        %691 = vmatpush.msra.mxu0 %v571
        %692 = vmatpush.msra.mxu0 %v569
        %693 = vmatpush.msra.mxu0 %v567
        %694 = vmatpush.msra.mxu0 %v565
        %695 = vmatpush.msra.mxu0 %v563
        %696 = vmatpush.msra.mxu0 %v561
        %697 = vmatpush.msra.mxu0 %v559
        %698 = vmatpush.msra.mxu0 %v557
        %699 = vmatpush.msra.mxu0 %v555
        %700 = vmatpush.msra.mxu0 %v553
        %701 = vmatpush.msra.mxu0 %v551
        %702 = vmatpush.msra.mxu0 %v549
        %703 = vmatpush.msra.mxu0 %v547
        %704 = vmatpush.msra.mxu0 %v545
        %705 = vmatmul.f32.gmra.mxu0 %v577
        %v706 = vpop.f32.mrf.mxu0
        %v707 = vadd.f32 %v612, %v706
        %708 = vmatmul.f32.gmra.mxu0 %v578
        %v709 = vpop.f32.mrf.mxu0
        %v710 = vadd.f32 %v617, %v709
        %711 = vmatmul.f32.gmra.mxu0 %v579
        %v712 = vpop.f32.mrf.mxu0
        %v713 = vadd.f32 %v622, %v712
        %714 = vmatmul.f32.gmra.mxu0 %v580
        %v715 = vpop.f32.mrf.mxu0
        %v716 = vadd.f32 %v627, %v715
        %717 = vmatmul.f32.gmra.mxu0 %v581
        %v718 = vpop.f32.mrf.mxu0
        %v719 = vadd.f32 %v632, %v718
        %720 = vmatmul.f32.gmra.mxu0 %v582
        %v721 = vpop.f32.mrf.mxu0
        %v722 = vadd.f32 %v637, %v721
        %723 = vmatmul.f32.gmra.mxu0 %v583
        %v724 = vpop.f32.mrf.mxu0
        %v725 = vadd.f32 %v642, %v724
        %726 = vmatmul.f32.gmra.mxu0 %v584
        %v727 = vpop.f32.mrf.mxu0
        %v728 = vadd.f32 %v647, %v727
        %729 = vmatmul.f32.gmra.mxu0 %v585
        %v730 = vpop.f32.mrf.mxu0
        %v731 = vadd.f32 %v652, %v730
        %732 = vmatmul.f32.gmra.mxu0 %v586
        %v733 = vpop.f32.mrf.mxu0
        %v734 = vadd.f32 %v657, %v733
        %735 = vmatmul.f32.gmra.mxu0 %v587
        %v736 = vpop.f32.mrf.mxu0
        %v737 = vadd.f32 %v662, %v736
        %738 = vmatmul.f32.gmra.mxu0 %v588
        %v739 = vpop.f32.mrf.mxu0
        %v740 = vadd.f32 %v667, %v739
        %741 = vmatmul.f32.gmra.mxu0 %v589
        %v742 = vpop.f32.mrf.mxu0
        %v743 = vadd.f32 %v672, %v742
        %744 = vmatmul.f32.gmra.mxu0 %v590
        %v745 = vpop.f32.mrf.mxu0
        %v746 = vadd.f32 %v677, %v745
        %747 = vmatmul.f32.gmra.mxu0 %v591
        %v748 = vpop.f32.mrf.mxu0
        %v749 = vadd.f32 %v682, %v748
        %750 = vmatmul.f32.gmra.mxu0 %v592
        %v751 = vpop.f32.mrf.mxu0
        %v752 = vadd.f32 %v687, %v751
        %753 = vdwg.mxu0
        %754 = vmatpush.msra.mxu0 %v576
        %755 = vmatpush.msra.mxu0 %v574
        %756 = vmatpush.msra.mxu0 %v572
        %757 = vmatpush.msra.mxu0 %v570
        %758 = vmatpush.msra.mxu0 %v568
        %759 = vmatpush.msra.mxu0 %v566
        %760 = vmatpush.msra.mxu0 %v564
        %761 = vmatpush.msra.mxu0 %v562
        %762 = vmatpush.msra.mxu0 %v560
        %763 = vmatpush.msra.mxu0 %v558
        %764 = vmatpush.msra.mxu0 %v556
        %765 = vmatpush.msra.mxu0 %v554
        %766 = vmatpush.msra.mxu0 %v552
        %767 = vmatpush.msra.mxu0 %v550
        %768 = vmatpush.msra.mxu0 %v548
        %769 = vmatpush.msra.mxu0 %v546
        %770 = vmatmul.f32.gmra.mxu0 %v577
        %v771 = vpop.f32.mrf.mxu0
        %v772 = vadd.f32 %v612, %v771
        %773 = vmatmul.f32.gmra.mxu0 %v578
        %v774 = vpop.f32.mrf.mxu0
        %v775 = vadd.f32 %v617, %v774
        %776 = vmatmul.f32.gmra.mxu0 %v579
        %v777 = vpop.f32.mrf.mxu0
        %v778 = vadd.f32 %v622, %v777
        %779 = vmatmul.f32.gmra.mxu0 %v580
        %v780 = vpop.f32.mrf.mxu0
        %v781 = vadd.f32 %v627, %v780
        %782 = vmatmul.f32.gmra.mxu0 %v581
        %v783 = vpop.f32.mrf.mxu0
        %v784 = vadd.f32 %v632, %v783
        %785 = vmatmul.f32.gmra.mxu0 %v582
        %v786 = vpop.f32.mrf.mxu0
        %v787 = vadd.f32 %v637, %v786
        %788 = vmatmul.f32.gmra.mxu0 %v583
        %v789 = vpop.f32.mrf.mxu0
        %v790 = vadd.f32 %v642, %v789
        %791 = vmatmul.f32.gmra.mxu0 %v584
        %v792 = vpop.f32.mrf.mxu0
        %v793 = vadd.f32 %v647, %v792
        %794 = vmatmul.f32.gmra.mxu0 %v585
        %v795 = vpop.f32.mrf.mxu0
        %v796 = vadd.f32 %v652, %v795
        %797 = vmatmul.f32.gmra.mxu0 %v586
        %v798 = vpop.f32.mrf.mxu0
        %v799 = vadd.f32 %v657, %v798
        %800 = vmatmul.f32.gmra.mxu0 %v587
        %v801 = vpop.f32.mrf.mxu0
        %v802 = vadd.f32 %v662, %v801
        %803 = vmatmul.f32.gmra.mxu0 %v588
        %v804 = vpop.f32.mrf.mxu0
        %v805 = vadd.f32 %v667, %v804
        %806 = vmatmul.f32.gmra.mxu0 %v589
        %v807 = vpop.f32.mrf.mxu0
        %v808 = vadd.f32 %v672, %v807
        %809 = vmatmul.f32.gmra.mxu0 %v590
        %v810 = vpop.f32.mrf.mxu0
        %v811 = vadd.f32 %v677, %v810
        %812 = vmatmul.f32.gmra.mxu0 %v591
        %v813 = vpop.f32.mrf.mxu0
        %v814 = vadd.f32 %v682, %v813
        %815 = vmatmul.f32.gmra.mxu0 %v592
        %v816 = vpop.f32.mrf.mxu0
        %v817 = vadd.f32 %v687, %v816
        %818 = vdwg.mxu0
        %v819 = vmax.f32 %v707, 0.0
        %v820 = vmax.f32 %v772, 0.0
        %v821 = vmax.f32 %v710, 0.0
        %v822 = vmax.f32 %v775, 0.0
        %v823 = vmax.f32 %v713, 0.0
        %v824 = vmax.f32 %v778, 0.0
        %v825 = vmax.f32 %v716, 0.0
        %v826 = vmax.f32 %v781, 0.0
        %v827 = vmax.f32 %v719, 0.0
        %v828 = vmax.f32 %v784, 0.0
        %v829 = vmax.f32 %v722, 0.0
        %v830 = vmax.f32 %v787, 0.0
        %v831 = vmax.f32 %v725, 0.0
        %v832 = vmax.f32 %v790, 0.0
        %v833 = vmax.f32 %v728, 0.0
        %v834 = vmax.f32 %v793, 0.0
        %v835 = vmax.f32 %v731, 0.0
        %v836 = vmax.f32 %v796, 0.0
        %v837 = vmax.f32 %v734, 0.0
        %v838 = vmax.f32 %v799, 0.0
        %v839 = vmax.f32 %v737, 0.0
        %v840 = vmax.f32 %v802, 0.0
        %v841 = vmax.f32 %v740, 0.0
        %v842 = vmax.f32 %v805, 0.0
        %v843 = vmax.f32 %v743, 0.0
        %v844 = vmax.f32 %v808, 0.0
        %v845 = vmax.f32 %v746, 0.0
        %v846 = vmax.f32 %v811, 0.0
        %v847 = vmax.f32 %v749, 0.0
        %v848 = vmax.f32 %v814, 0.0
        %v849 = vmax.f32 %v752, 0.0
        %v850 = vmax.f32 %v817, 0.0
        %851 = vst [vmem:[%s240] sm:$0xff] %v819
        %852 = vst [vmem:[%s240 + $0x8] sm:$0xff] %v820
        %853 = vst [vmem:[%s240 + $0x10] sm:$0xff] %v821
        %854 = vst [vmem:[%s240 + $0x18] sm:$0xff] %v822
        %855 = vst [vmem:[%s240 + $0x20] sm:$0xff] %v823
        %856 = vst [vmem:[%s240 + $0x28] sm:$0xff] %v824
        %857 = vst [vmem:[%s240 + $0x30] sm:$0xff] %v825
        %858 = vst [vmem:[%s240 + $0x38] sm:$0xff] %v826
        %859 = vst [vmem:[%s240 + $0x40] sm:$0xff] %v827
        %860 = vst [vmem:[%s240 + $0x48] sm:$0xff] %v828
        %861 = vst [vmem:[%s240 + $0x50] sm:$0xff] %v829
        %862 = vst [vmem:[%s240 + $0x58] sm:$0xff] %v830
        %863 = vst [vmem:[%s240 + $0x60] sm:$0xff] %v831
        %864 = vst [vmem:[%s240 + $0x68] sm:$0xff] %v832
        %865 = vst [vmem:[%s240 + $0x70] sm:$0xff] %v833
        %866 = vst [vmem:[%s240 + $0x78] sm:$0xff] %v834
        %867 = vst [vmem:[%s240 + $0x80] sm:$0xff] %v835
        %868 = vst [vmem:[%s240 + $0x88] sm:$0xff] %v836
        %869 = vst [vmem:[%s240 + $0x90] sm:$0xff] %v837
        %870 = vst [vmem:[%s240 + $0x98] sm:$0xff] %v838
        %871 = vst [vmem:[%s240 + $0xa0] sm:$0xff] %v839
        %872 = vst [vmem:[%s240 + $0xa8] sm:$0xff] %v840
        %873 = vst [vmem:[%s240 + $0xb0] sm:$0xff] %v841
        %874 = vst [vmem:[%s240 + $0xb8] sm:$0xff] %v842
        %875 = vst [vmem:[%s240 + $0xc0] sm:$0xff] %v843
        %876 = vst [vmem:[%s240 + $0xc8] sm:$0xff] %v844
        %877 = vst [vmem:[%s240 + $0xd0] sm:$0xff] %v845
        %878 = vst [vmem:[%s240 + $0xd8] sm:$0xff] %v846
        %879 = vst [vmem:[%s240 + $0xe0] sm:$0xff] %v847
        %880 = vst [vmem:[%s240 + $0xe8] sm:$0xff] %v848
        %881 = vst [vmem:[%s240 + $0xf0] sm:$0xff] %v849
        %882 = vst [vmem:[%s240 + $0xf8] sm:$0xff] %v850
        %s883 = sand.u32 %s153, 1
        %s884 = scalar_lea.sflag [#allocation3], %s883
        %s885 = sand.u32 %s153, 1
        %s886 = smul.addr %s885, 256
        %s887 = scalar_lea.vmem [#allocation2], %s886
        // Predicated region
        $region41: #{tpu_custom_call.1} parent=39 // pred_check
          %p888 = pneg %p163
        $region42: #{tpu_custom_call.1} parent=39 // pred_check_branch
          %890 = sbr.rel (%p888) target = $region44
        $region43: #{tpu_custom_call.1} parent=39 // pred_region
          %s891 = smul.u32 2, %s24
          %893 = vsyncadd %s884, 0
          %s894 = smul.addr %s23, 32
          %s895 = sadd.s32 %s891, %s894
          %s896 = smul.addr %s895, 8
          %s897 = scalar_lea.hbm %s5, %s896
          %s898 = sshll.u32 %s887, 4
          %s899 = int_to_ptr.vmem [resolvable:$true] %s898
          %s900 = sshll.u32 %s897, 4
          %s901 = int_to_ptr.hbm [resolvable:$true] %s900
          %906 = dma.vmem_to_hbm [thread:$0]  %s899, 4096, %s901, %s884, 256, 256, 16
        $region44: #{tpu_custom_call.1} parent=39 // pred_fallthru
          _
      $region40: #{tpu_custom_call.1} parent=5 // pred_fallthru
        _
      %p907 = scmp.le.s32.totalorder 2, %s14
      // Predicated region
      $region45: #{tpu_custom_call.1} parent=5 // pred_check
        %p908 = pneg %p907
      $region46: #{tpu_custom_call.1} parent=5 // pred_check_branch
        %910 = sbr.rel (%p908) target = $region48
      $region47: #{tpu_custom_call.1} parent=5 // pred_region
        %s911 = ssub.s32 %s14, 2
        // Predicated region
        $region49: #{tpu_custom_call.1} parent=47 // pred_check
          %p912 = pneg %p169
        $region50: #{tpu_custom_call.1} parent=47 // pred_check_branch
          %914 = sbr.rel (%p912) target = $region52
        $region51: #{tpu_custom_call.1} parent=47 // pred_region
          %s915 = sand.u32 %s154, 1
          %s916 = scalar_lea.sflag [#allocation3], %s915
          %s917 = sand.u32 %s154, 1
          %s918 = smul.addr %s917, 256
          %s919 = scalar_lea.vmem [#allocation2], %s918
          %921 = dma.done %s916, 4096
        $region52: #{tpu_custom_call.1} parent=47 // pred_fallthru
          _
      $region48: #{tpu_custom_call.1} parent=5 // pred_fallthru
        _
    $region6: #{tpu_custom_call.1} parent=1 // loop_footer
      %s18 = sadd.s32 1, %s14
    $region7: #{tpu_custom_call.1} parent=1 // loop_footer_branch
      %13 = sbr.rel target = $region3
    $region8: #{tpu_custom_call.1} parent=1 // loop_exit
      _
    %922 = vsyncpa [#allocation3], 1
    %s923 = scalar_lea.sflag [#allocation3], 1
    %924 = vsyncpa %s923, 1

</llo_original>
